<compile_context>
chip_gen: v7x
topology: tpu7x:2x2x1
jax: 0.10.0
libtpu: 0.0.40
codegen_flags: <defaults>
</compile_context>

<pallas_src>
import functools

import numpy as np
import jax
import jax.numpy as jnp
from jax import lax
from jax.experimental import pallas as pl
from jax.experimental.pallas import tpu as pltpu


def _downsample_kernel(s00_ref, s01_ref, s10_ref, s11_ref, w_ref, b_ref, o_ref,
                       *, whp, l, cout_p):
    # slab refs: (1, 1, Cin_p, Ls) bf16, layout [row parity][col parity]
    # w_ref: (4*Cout_p, 16*Cin_p) bf16 ; b_ref: (Cout_p, 1) f32 ; o_ref: (1, 1, Cout_p, L)
    slabs = ((s00_ref, s01_ref), (s10_ref, s11_ref))
    # 16 distinct windows (4 slabs x 4 static lane offsets {0, 1, whp, whp+1}), stacked along
    # the sublane/contraction axis -> (16*Cin_p, L).  Order must match the host weight packing.
    wins = []
    for rp in range(2):
        for ra in range(2):
            for cp in range(2):
                for ca in range(2):
                    start = ra * whp + ca                              # static offset
                    wins.append(slabs[rp][cp][0, 0, :, start:start + l])   # (Cin_p, L) bf16
    rhs = jnp.concatenate(wins, axis=0)                                # (16*Cin_p, L) bf16
    # One MXU matmul for the whole conv at all 4 pool positions, f32 accumulation.
    res = jnp.dot(w_ref[...], rhs, preferred_element_type=jnp.float32)  # (4*Cout_p, L) f32
    # 2x2 max pool = max over the 4 pool-position row blocks (sublane-aligned slices).
    pooled = jnp.maximum(
        jnp.maximum(res[0 * cout_p:1 * cout_p], res[1 * cout_p:2 * cout_p]),
        jnp.maximum(res[2 * cout_p:3 * cout_p], res[3 * cout_p:4 * cout_p]))
    o_ref[0, 0] = jnp.maximum(pooled + b_ref[...], 0.0).astype(o_ref.dtype)


def _pick_row_tile(hh, whp, cin_p, cout_p, budget_bytes=40 * 1024 * 1024):
    """Largest pooled-row tile whose per-step VMEM footprint fits the budget (prefers the
    whole image: ntiles == 1 -> lane-dense output, no halo duplication, no transpose)."""
    def vmem_bytes(tp):
        ls, l = (tp + 2) * whp, tp * whp
        slabs = 4 * 2 * cin_p * ls * 2            # 4 parity slabs x double buffer, bf16
        outb = 2 * cout_p * l * 4                 # output block x double buffer, f32
        rhs = 2 * 16 * cin_p * l * 2              # stacked RHS + window temporaries, bf16
        acc = 5 * cout_p * l * 4                  # (4*Cout_p, L) dot result + pooled, f32
        wts = 2 * (4 * cout_p * 16 * cin_p * 2 + cout_p * 4)
        return slabs + outb + rhs + acc + wts
    for tp in range(hh, 0, -1):
        if vmem_bytes(tp) <= budget_bytes:
            return tp
    return 1


def downsample_block(x_nchw, conv_w, conv_b, out_dtype=jnp.float32):
    """Conv2d(3x3, s=1, p=1, bias) -> ReLU -> MaxPool2d(2,2); conv_w is OIHW, I/O in NCHW."""
    n, cin, h, w = x_nchw.shape
    cout = conv_w.shape[0]
    # TODO(synk): odd H/W (PyTorch MaxPool2d(2,2) floors); only even spatial sizes handled.
    assert h % 2 == 0 and w % 2 == 0, "even spatial sizes required"
    hh, wh = h // 2, w // 2
    whp = wh + 1                                  # half-grid row width (one junk lane per row)

    cin_p = -(-cin // 16) * 16                    # bf16 sublane tile alignment
    cout_p = -(-cout // 8) * 8                    # f32 sublane tile alignment

    tp = _pick_row_tile(hh, whp, cin_p, cout_p)   # pooled rows per grid step
    ntiles = -(-hh // tp)
    hh_pad = ntiles * tp
    ls = (tp + 2) * whp                           # slab length (2 halo half-rows)
    l = tp * whp                                  # per-step flattened pooled-spatial (lanes)

    # conv zero-padding + channel padding; feed the MXU in bf16 (f32 accumulation in-kernel)
    xp = jnp.pad(x_nchw, ((0, 0), (0, cin_p - cin), (1, 1), (1, 1))).astype(jnp.bfloat16)

    def make_slabs(pr, pc):
        g = xp[:, :, pr::2, pc::2]                                    # (N, Cin_p, hh+1, whp)
        g = jnp.pad(g, ((0, 0), (0, 0), (0, hh_pad - hh + 1), (0, 0)))  # (N, Cin_p, hh_pad+2, whp)
        if ntiles == 1:
            return g.reshape(n, 1, cin_p, ls)     # no duplication, no extra stacking pass
        # TODO(synk): ntiles > 1 (very large images) still stacks overlapping row slabs in HBM;
        # a memory_space=pl.ANY + manual make_async_copy variant would avoid the extra pass.
        s = jnp.stack([g[:, :, j * tp:j * tp + tp + 2, :] for j in range(ntiles)], axis=1)
        return s.reshape(n, ntiles, cin_p, ls)

    slabs = [make_slabs(pr, pc) for pr in range(2) for pc in range(2)]

    # Fold taps + pool positions into one (4*Cout_p, 16*Cin_p) weight matching the kernel's
    # RHS block order b = ((rp*2+ra)*2+cp)*2+ca; unused (pool-pos, block) pairs stay zero.
    sel = np.zeros((4, 16, 3, 3), np.float32)
    for dr in range(2):
        for dc in range(2):
            for ky in range(3):
                for kx in range(3):
                    rp, ra = (dr + ky) % 2, (dr + ky) // 2
                    cp, ca = (dc + kx) % 2, (dc + kx) // 2
                    b = ((rp * 2 + ra) * 2 + cp) * 2 + ca
                    sel[dr * 2 + dc, b, ky, kx] = 1.0
    wb = jnp.einsum("pbyx,oiyx->pobi", jnp.asarray(sel), conv_w.astype(jnp.float32))
    w_big = jnp.zeros((4, cout_p, 16, cin_p), jnp.float32).at[:, :cout, :, :cin].set(wb)
    w_big = w_big.reshape(4 * cout_p, 16 * cin_p).astype(jnp.bfloat16)

    bias = jnp.zeros((cout_p, 1), jnp.float32).at[:cout, 0].set(conv_b.astype(jnp.float32))

    slab_spec = pl.BlockSpec((1, 1, cin_p, ls), lambda i, j: (i, j, 0, 0))
    out = pl.pallas_call(
        functools.partial(_downsample_kernel, whp=whp, l=l, cout_p=cout_p),
        out_shape=jax.ShapeDtypeStruct((n, ntiles, cout_p, l), out_dtype),
        grid=(n, ntiles),
        in_specs=[slab_spec, slab_spec, slab_spec, slab_spec,
                  pl.BlockSpec((4 * cout_p, 16 * cin_p), lambda i, j: (0, 0)),
                  pl.BlockSpec((cout_p, 1), lambda i, j: (0, 0))],
        out_specs=pl.BlockSpec((1, 1, cout_p, l), lambda i, j: (i, j, 0, 0)),
        compiler_params=pltpu.CompilerParams(
            dimension_semantics=("parallel", "parallel"),
            vmem_limit_bytes=48 * 1024 * 1024),
    )(*slabs, w_big, bias)

    # (N, T, Cout_p, tp*whp) -> (N, Cout, H/2, W/2).  With ntiles == 1 (the common case) the
    # transpose only moves a size-1 axis, so no extra HBM pass; the slices drop the junk
    # column, channel padding and padded rows.
    out = out.reshape(n, ntiles, cout_p, tp, whp)
    out = jnp.transpose(out, (0, 2, 1, 3, 4)).reshape(n, cout_p, hh_pad, whp)
    return out[:, :cout, :hh, :wh]


def _reference(x_nchw, conv_w, conv_b):
    y = lax.conv_general_dilated(
        x_nchw, conv_w, window_strides=(1, 1), padding=((1, 1), (1, 1)),
        dimension_numbers=("NCHW", "OIHW", "NCHW"), precision=lax.Precision.HIGHEST)
    y = y + conv_b.reshape(1, -1, 1, 1)
    y = jnp.maximum(y, 0.0)
    y = lax.reduce_window(y, -jnp.inf, lax.max, (1, 1, 2, 2), (1, 1, 2, 2), "VALID")
    return y


if __name__ == "__main__":
    key = jax.random.PRNGKey(0)
    k1, k2, k3 = jax.random.split(key, 3)
    N, Cin, Cout, H, W = 2, 4, 8, 16, 16

    x = jax.random.normal(k1, (N, Cin, H, W), jnp.float32)
    # deterministic synthetic params (Conv2d(c_in=4, c_out=8, k=3) weight + bias)
    conv_w = 0.1 * jax.random.normal(k2, (Cout, Cin, 3, 3), jnp.float32)
    conv_b = 0.1 * jax.random.normal(k3, (Cout,), jnp.float32)

    out = jax.block_until_ready(downsample_block(x, conv_w, conv_b))

    # reference uses the same bf16-rounded conv inputs (kernel feeds the MXU in bf16, f32 accum)
    xr = x.astype(jnp.bfloat16).astype(jnp.float32)
    wr = conv_w.astype(jnp.bfloat16).astype(jnp.float32)
    ref = _reference(xr, wr, conv_b)

    assert out.shape == (N, Cout, H // 2, W // 2), out.shape
    max_err = float(jnp.max(jnp.abs(out - ref)))
    assert jnp.allclose(out, ref, atol=1e-3, rtol=1e-3), max_err
    print("KERNEL_OK")
</pallas_src>

<mosaic_0001>
module attributes {stable_mosaic.version = 11 : i64} {
  func.func @_downsample_kernel(%arg0: i32, %arg1: i32, %arg2: memref<1x1x16x90xbf16, #tpu.memory_space<vmem>>, %arg3: memref<1x1x16x90xbf16, #tpu.memory_space<vmem>>, %arg4: memref<1x1x16x90xbf16, #tpu.memory_space<vmem>>, %arg5: memref<1x1x16x90xbf16, #tpu.memory_space<vmem>>, %arg6: memref<32x256xbf16, #tpu.memory_space<vmem>>, %arg7: memref<8x1xf32, #tpu.memory_space<vmem>>, %arg8: memref<1x1x8x72xf32, #tpu.memory_space<vmem>>) attributes {dimension_semantics = [#tpu.dimension_semantics<parallel>, #tpu.dimension_semantics<parallel>], iteration_bounds = array<i64: 2, 1>, scalar_prefetch = 0 : i64, scratch_operands = 0 : i64, tpu.core_type = #tpu.core_type<tc>, window_params = [{transform_indices = @transform_0, window_bounds = array<i64: 1, 1, 16, 90>}, {transform_indices = @transform_1, window_bounds = array<i64: 1, 1, 16, 90>}, {transform_indices = @transform_2, window_bounds = array<i64: 1, 1, 16, 90>}, {transform_indices = @transform_3, window_bounds = array<i64: 1, 1, 16, 90>}, {pipeline_mode = #tpu.pipeline_mode<synchronous>, transform_indices = @transform_4, window_bounds = array<i64: 32, 256>}, {pipeline_mode = #tpu.pipeline_mode<synchronous>, transform_indices = @transform_5, window_bounds = array<i64: 8, 1>}, {transform_indices = @transform_6, window_bounds = array<i64: 1, 1, 8, 72>}]} {
    %c0 = arith.constant 0 : index
    %c0_0 = arith.constant 0 : index
    %c0_1 = arith.constant 0 : index
    %c0_2 = arith.constant 0 : index
    %0 = vector.load %arg2[%c0, %c0_0, %c0_1, %c0_2] : memref<1x1x16x90xbf16, #tpu.memory_space<vmem>>, vector<1x1x16x72xbf16>
    %1 = vector.shape_cast %0 : vector<1x1x16x72xbf16> to vector<16x72xbf16>
    %c0_3 = arith.constant 0 : index
    %c0_4 = arith.constant 0 : index
    %c0_5 = arith.constant 0 : index
    %c1 = arith.constant 1 : index
    %2 = vector.load %arg2[%c0_3, %c0_4, %c0_5, %c1] : memref<1x1x16x90xbf16, #tpu.memory_space<vmem>>, vector<1x1x16x72xbf16>
    %3 = vector.shape_cast %2 : vector<1x1x16x72xbf16> to vector<16x72xbf16>
    %c0_6 = arith.constant 0 : index
    %c0_7 = arith.constant 0 : index
    %c0_8 = arith.constant 0 : index
    %c0_9 = arith.constant 0 : index
    %4 = vector.load %arg3[%c0_6, %c0_7, %c0_8, %c0_9] : memref<1x1x16x90xbf16, #tpu.memory_space<vmem>>, vector<1x1x16x72xbf16>
    %5 = vector.shape_cast %4 : vector<1x1x16x72xbf16> to vector<16x72xbf16>
    %c0_10 = arith.constant 0 : index
    %c0_11 = arith.constant 0 : index
    %c0_12 = arith.constant 0 : index
    %c1_13 = arith.constant 1 : index
    %6 = vector.load %arg3[%c0_10, %c0_11, %c0_12, %c1_13] : memref<1x1x16x90xbf16, #tpu.memory_space<vmem>>, vector<1x1x16x72xbf16>
    %7 = vector.shape_cast %6 : vector<1x1x16x72xbf16> to vector<16x72xbf16>
    %c0_14 = arith.constant 0 : index
    %c0_15 = arith.constant 0 : index
    %c0_16 = arith.constant 0 : index
    %c9 = arith.constant 9 : index
    %8 = vector.load %arg2[%c0_14, %c0_15, %c0_16, %c9] : memref<1x1x16x90xbf16, #tpu.memory_space<vmem>>, vector<1x1x16x72xbf16>
    %9 = vector.shape_cast %8 : vector<1x1x16x72xbf16> to vector<16x72xbf16>
    %c0_17 = arith.constant 0 : index
    %c0_18 = arith.constant 0 : index
    %c0_19 = arith.constant 0 : index
    %c10 = arith.constant 10 : index
    %10 = vector.load %arg2[%c0_17, %c0_18, %c0_19, %c10] : memref<1x1x16x90xbf16, #tpu.memory_space<vmem>>, vector<1x1x16x72xbf16>
    %11 = vector.shape_cast %10 : vector<1x1x16x72xbf16> to vector<16x72xbf16>
    %c0_20 = arith.constant 0 : index
    %c0_21 = arith.constant 0 : index
    %c0_22 = arith.constant 0 : index
    %c9_23 = arith.constant 9 : index
    %12 = vector.load %arg3[%c0_20, %c0_21, %c0_22, %c9_23] : memref<1x1x16x90xbf16, #tpu.memory_space<vmem>>, vector<1x1x16x72xbf16>
    %13 = vector.shape_cast %12 : vector<1x1x16x72xbf16> to vector<16x72xbf16>
    %c0_24 = arith.constant 0 : index
    %c0_25 = arith.constant 0 : index
    %c0_26 = arith.constant 0 : index
    %c10_27 = arith.constant 10 : index
    %14 = vector.load %arg3[%c0_24, %c0_25, %c0_26, %c10_27] : memref<1x1x16x90xbf16, #tpu.memory_space<vmem>>, vector<1x1x16x72xbf16>
    %15 = vector.shape_cast %14 : vector<1x1x16x72xbf16> to vector<16x72xbf16>
    %c0_28 = arith.constant 0 : index
    %c0_29 = arith.constant 0 : index
    %c0_30 = arith.constant 0 : index
    %c0_31 = arith.constant 0 : index
    %16 = vector.load %arg4[%c0_28, %c0_29, %c0_30, %c0_31] : memref<1x1x16x90xbf16, #tpu.memory_space<vmem>>, vector<1x1x16x72xbf16>
    %17 = vector.shape_cast %16 : vector<1x1x16x72xbf16> to vector<16x72xbf16>
    %c0_32 = arith.constant 0 : index
    %c0_33 = arith.constant 0 : index
    %c0_34 = arith.constant 0 : index
    %c1_35 = arith.constant 1 : index
    %18 = vector.load %arg4[%c0_32, %c0_33, %c0_34, %c1_35] : memref<1x1x16x90xbf16, #tpu.memory_space<vmem>>, vector<1x1x16x72xbf16>
    %19 = vector.shape_cast %18 : vector<1x1x16x72xbf16> to vector<16x72xbf16>
    %c0_36 = arith.constant 0 : index
    %c0_37 = arith.constant 0 : index
    %c0_38 = arith.constant 0 : index
    %c0_39 = arith.constant 0 : index
    %20 = vector.load %arg5[%c0_36, %c0_37, %c0_38, %c0_39] : memref<1x1x16x90xbf16, #tpu.memory_space<vmem>>, vector<1x1x16x72xbf16>
    %21 = vector.shape_cast %20 : vector<1x1x16x72xbf16> to vector<16x72xbf16>
    %c0_40 = arith.constant 0 : index
    %c0_41 = arith.constant 0 : index
    %c0_42 = arith.constant 0 : index
    %c1_43 = arith.constant 1 : index
    %22 = vector.load %arg5[%c0_40, %c0_41, %c0_42, %c1_43] : memref<1x1x16x90xbf16, #tpu.memory_space<vmem>>, vector<1x1x16x72xbf16>
    %23 = vector.shape_cast %22 : vector<1x1x16x72xbf16> to vector<16x72xbf16>
    %c0_44 = arith.constant 0 : index
    %c0_45 = arith.constant 0 : index
    %c0_46 = arith.constant 0 : index
    %c9_47 = arith.constant 9 : index
    %24 = vector.load %arg4[%c0_44, %c0_45, %c0_46, %c9_47] : memref<1x1x16x90xbf16, #tpu.memory_space<vmem>>, vector<1x1x16x72xbf16>
    %25 = vector.shape_cast %24 : vector<1x1x16x72xbf16> to vector<16x72xbf16>
    %c0_48 = arith.constant 0 : index
    %c0_49 = arith.constant 0 : index
    %c0_50 = arith.constant 0 : index
    %c10_51 = arith.constant 10 : index
    %26 = vector.load %arg4[%c0_48, %c0_49, %c0_50, %c10_51] : memref<1x1x16x90xbf16, #tpu.memory_space<vmem>>, vector<1x1x16x72xbf16>
    %27 = vector.shape_cast %26 : vector<1x1x16x72xbf16> to vector<16x72xbf16>
    %c0_52 = arith.constant 0 : index
    %c0_53 = arith.constant 0 : index
    %c0_54 = arith.constant 0 : index
    %c9_55 = arith.constant 9 : index
    %28 = vector.load %arg5[%c0_52, %c0_53, %c0_54, %c9_55] : memref<1x1x16x90xbf16, #tpu.memory_space<vmem>>, vector<1x1x16x72xbf16>
    %29 = vector.shape_cast %28 : vector<1x1x16x72xbf16> to vector<16x72xbf16>
    %c0_56 = arith.constant 0 : index
    %c0_57 = arith.constant 0 : index
    %c0_58 = arith.constant 0 : index
    %c10_59 = arith.constant 10 : index
    %30 = vector.load %arg5[%c0_56, %c0_57, %c0_58, %c10_59] : memref<1x1x16x90xbf16, #tpu.memory_space<vmem>>, vector<1x1x16x72xbf16>
    %31 = vector.shape_cast %30 : vector<1x1x16x72xbf16> to vector<16x72xbf16>
    %32 = tpu.concatenate %1, %3, %5, %7, %9, %11, %13, %15, %17, %19, %21, %23, %25, %27, %29, %31 in 0 : vector<16x72xbf16>, vector<16x72xbf16>, vector<16x72xbf16>, vector<16x72xbf16>, vector<16x72xbf16>, vector<16x72xbf16>, vector<16x72xbf16>, vector<16x72xbf16>, vector<16x72xbf16>, vector<16x72xbf16>, vector<16x72xbf16>, vector<16x72xbf16>, vector<16x72xbf16>, vector<16x72xbf16>, vector<16x72xbf16>, vector<16x72xbf16> -> vector<256x72xbf16>
    %c0_60 = arith.constant 0 : index
    %c0_61 = arith.constant 0 : index
    %33 = vector.load %arg6[%c0_60, %c0_61] : memref<32x256xbf16, #tpu.memory_space<vmem>>, vector<32x256xbf16>
    %cst = arith.constant dense<0.000000e+00> : vector<32x72xf32>
    %34 = tpu.matmul %33, %32, %cst {dimension_numbers = #tpu.dot_dimension_numbers<[1], [0], [0], [1], [0, 0, 1, 1], [], []>} : vector<32x256xbf16>, vector<256x72xbf16>, vector<32x72xf32> -> vector<32x72xf32>
    %35 = vector.extract_strided_slice %34 {offsets = [0, 0], sizes = [8, 72], strides = [1, 1]} : vector<32x72xf32> to vector<8x72xf32>
    %36 = vector.extract_strided_slice %34 {offsets = [8, 0], sizes = [8, 72], strides = [1, 1]} : vector<32x72xf32> to vector<8x72xf32>
    %37 = arith.maximumf %35, %36 : vector<8x72xf32>
    %38 = vector.extract_strided_slice %34 {offsets = [16, 0], sizes = [8, 72], strides = [1, 1]} : vector<32x72xf32> to vector<8x72xf32>
    %39 = vector.extract_strided_slice %34 {offsets = [24, 0], sizes = [8, 72], strides = [1, 1]} : vector<32x72xf32> to vector<8x72xf32>
    %40 = arith.maximumf %38, %39 : vector<8x72xf32>
    %41 = arith.maximumf %37, %40 : vector<8x72xf32>
    %c0_62 = arith.constant 0 : index
    %c0_63 = arith.constant 0 : index
    %42 = vector.load %arg7[%c0_62, %c0_63] : memref<8x1xf32, #tpu.memory_space<vmem>>, vector<8x1xf32>
    %43 = vector.broadcast %42 : vector<8x1xf32> to vector<8x72xf32>
    %44 = arith.addf %41, %43 : vector<8x72xf32>
    %cst_64 = arith.constant 0.000000e+00 : f32
    %45 = vector.broadcast %cst_64 : f32 to vector<8x72xf32>
    %46 = arith.maximumf %44, %45 : vector<8x72xf32>
    %c0_65 = arith.constant 0 : index
    %c0_66 = arith.constant 0 : index
    %c0_67 = arith.constant 0 : index
    %c0_68 = arith.constant 0 : index
    %47 = vector.load %arg8[%c0_65, %c0_66, %c0_67, %c0_68] : memref<1x1x8x72xf32, #tpu.memory_space<vmem>>, vector<1x1x8x72xf32>
    %48 = vector.shape_cast %47 : vector<1x1x8x72xf32> to vector<8x72xf32>
    %49 = vector.shape_cast %46 : vector<8x72xf32> to vector<1x1x8x72xf32>
    tpu.vector_store %arg8[%c0_65, %c0_66, %c0_67, %c0_68], %49 {strides = array<i32>} : memref<1x1x8x72xf32, #tpu.memory_space<vmem>>, vector<1x1x8x72xf32>,
    return
  }
  func.func @transform_0(%arg0: i32, %arg1: i32) -> (i32, i32, i32, i32) {
    %c0_i32 = arith.constant 0 : i32
    %c0_i32_0 = arith.constant 0 : i32
    %c0_i32_1 = arith.constant 0 : i32
    return %arg0, %arg1, %c0_i32, %c0_i32_0 : i32, i32, i32, i32
  }
  func.func @transform_1(%arg0: i32, %arg1: i32) -> (i32, i32, i32, i32) {
    %c0_i32 = arith.constant 0 : i32
    %c0_i32_0 = arith.constant 0 : i32
    %c0_i32_1 = arith.constant 0 : i32
    return %arg0, %arg1, %c0_i32, %c0_i32_0 : i32, i32, i32, i32
  }
  func.func @transform_2(%arg0: i32, %arg1: i32) -> (i32, i32, i32, i32) {
    %c0_i32 = arith.constant 0 : i32
    %c0_i32_0 = arith.constant 0 : i32
    %c0_i32_1 = arith.constant 0 : i32
    return %arg0, %arg1, %c0_i32, %c0_i32_0 : i32, i32, i32, i32
  }
  func.func @transform_3(%arg0: i32, %arg1: i32) -> (i32, i32, i32, i32) {
    %c0_i32 = arith.constant 0 : i32
    %c0_i32_0 = arith.constant 0 : i32
    %c0_i32_1 = arith.constant 0 : i32
    return %arg0, %arg1, %c0_i32, %c0_i32_0 : i32, i32, i32, i32
  }
  func.func @transform_4(%arg0: i32, %arg1: i32) -> (i32, i32) {
    %c0_i32 = arith.constant 0 : i32
    %c0_i32_0 = arith.constant 0 : i32
    %c0_i32_1 = arith.constant 0 : i32
    return %c0_i32, %c0_i32_0 : i32, i32
  }
  func.func @transform_5(%arg0: i32, %arg1: i32) -> (i32, i32) {
    %c0_i32 = arith.constant 0 : i32
    %c0_i32_0 = arith.constant 0 : i32
    %c0_i32_1 = arith.constant 0 : i32
    return %c0_i32, %c0_i32_0 : i32, i32
  }
  func.func @transform_6(%arg0: i32, %arg1: i32) -> (i32, i32, i32, i32) {
    %c0_i32 = arith.constant 0 : i32
    %c0_i32_0 = arith.constant 0 : i32
    %c0_i32_1 = arith.constant 0 : i32
    return %arg0, %arg1, %c0_i32, %c0_i32_0 : i32, i32, i32, i32
  }
}

</mosaic_0001>

<llo_original>
// kernel: tpu_custom_call.1
$region0: #{tpu_custom_call.1}
  #allocation0 [shape = 'u32[]', space=smem, size = 0x4, offset = 0x4, fixed_abs, tag = 'smem constant byte address 0x4 - core index']
  #allocation1 [shape = 'u32[144,128]{1,0:T(1,128)}', space=vmem, size = 0x12000, scoped, tag = 'internal scratch']
  %s0 = inlined_call_operand.hbm [shape: bf16[2,1,16,90], index: 0, kind: input, shape index: {}]
  %s1 = inlined_call_operand.hbm [shape: bf16[2,1,16,90], index: 1, kind: input, shape index: {}]
  %s2 = inlined_call_operand.vmem [shape: bf16[2,1,16,90], index: 2, kind: input, shape index: {}]
  %s3 = inlined_call_operand.hbm [shape: bf16[2,1,16,90], index: 3, kind: input, shape index: {}]
  %s4 = inlined_call_operand.hbm [shape: bf16[32,256], index: 4, kind: input, shape index: {}]
  %s5 = inlined_call_operand.vmem [shape: f32[8,1], index: 5, kind: input, shape index: {}]
  %s6 = inlined_call_operand.hbm [shape: f32[2,1,8,72], index: 6, kind: output, shape index: {}]
  %s7 = sld [smem:[#allocation0]]
  $region73: #{tpu_custom_call.1} parent=0
    _
  %s9 = ssub.s32 1, %s7
  %s10 = scalar_select 0, %s9, %s7
  $region1: #{tpu_custom_call.1} parent=0
    #allocation2 [shape = 'u8[8192]{0}', space=vmem, size = 0x2000, scoped, tag = 'input window, operand 0']
    #allocation3 [shape = 's32[2]{0}', space=sflag, size = 0x8, scoped, tag = 'scoped memory for tpu_custom_call.1']
    #allocation4 [shape = 's32[2]{0}', space=sflag, size = 0x8, scoped, tag = 'scoped memory for tpu_custom_call.1']
    #allocation5 [shape = 'u8[8192]{0}', space=vmem, size = 0x2000, scoped, tag = 'input window, operand 1']
    #allocation6 [shape = 's32[2]{0}', space=sflag, size = 0x8, scoped, tag = 'scoped memory for tpu_custom_call.1']
    #allocation7 [shape = 'u8[8192]{0}', space=vmem, size = 0x2000, scoped, tag = 'input window, operand 3']
    #allocation8 [shape = 'u8[16384]{0}', space=vmem, size = 0x4000, scoped, tag = 'input window, operand 4, single buffered']
    #allocation9 [shape = 's32[1]{0}', space=sflag, size = 0x4, scoped, tag = 'scoped memory for tpu_custom_call.1']
    #allocation10 [shape = 'u8[8192]{0}', space=vmem, size = 0x2000, scoped, tag = 'output window, operand 0']
    %11 = vsyncpa [#allocation3], 0
    %s12 = scalar_lea.sflag [#allocation3], 1
    %13 = vsyncpa %s12, 0
    %14 = vsyncpa [#allocation6], 0
    %s15 = scalar_lea.sflag [#allocation6], 1
    %16 = vsyncpa %s15, 0
    %17 = vsyncpa [#allocation9], 0
    %18 = vsyncpa [#allocation4], 0
    %s19 = scalar_lea.sflag [#allocation4], 1
    %20 = vsyncpa %s19, 0
    loop: start=0, step=1, limit=4
    $region2: #{tpu_custom_call.1} parent=1 // loop_pre_header
      _
    $region3: #{tpu_custom_call.1} parent=1 // loop_header
      %s22 = sphi 0, %s26
      %p23 = scmp.ge.s32.totalorder %s22, 4
      %s29 = sphi 0, %s41
      %s30 = sphi 0, %s37
      %s31 = sphi 0, %s29
      %s32 = sphi 0, %s30
      %s33 = sphi 0, %s31
      %s34 = sphi 0, %s32
      %s46 = sphi 0, %s48
      %s49 = sphi 0, %s46
      %s50 = sphi 0, %s49
      %s66 = sphi 0, %s50
      %s74 = sphi 0, %s76
      %s77 = sphi 0, %s74
      %s78 = sphi 0, %s77
      %s94 = sphi 0, %s78
      %s102 = sphi 0, %s104
      %s105 = sphi 0, %s102
      %s106 = sphi 0, %s105
      %s122 = sphi 0, %s106
      %s130 = sphi 0, %s132
      %s133 = sphi 0, %s130
      %s134 = sphi 0, %s133
      %s150 = sphi 0, %s134
      %s154 = sphi 0, %s154
      %s156 = sphi 0, %s154
      %s157 = sphi 0, %s156
      %s171 = sphi 0, %s157
      %s175 = sphi 0, %s175
      %s177 = sphi 0, %s175
      %s178 = sphi 0, %s177
      %s192 = sphi 0, %s178
      %s200 = sphi 0, %s202
      %s203 = sphi 0, %s200
      %s204 = sphi 0, %s203
      %s220 = sphi 0, %s204
    $region4: #{tpu_custom_call.1} parent=1 // loop_header_branch
      %25 = sbr.rel (%p23) target = $region8
    $region5: #{tpu_custom_call.1} parent=1 // loop_body
      %s27 = ssub.s32 %s22, 1
      %s28 = ssub.s32 %s22, 2
      %s35 = sadd.s32 1, %s30
      %p36 = scmp.ge.s32.totalorder %s35, 1
      %s37 = scalar_select %p36, 0, %s35
      %s38 = sadd.s32 1, %s29
      %s39 = scalar_select %p36, %s38, %s29
      %p40 = scmp.ge.s32.totalorder %s39, 2
      %s41 = scalar_select %p40, 0, %s39
      %s42 = ssub.s32 %s29, %s41
      %s43 = ssub.s32 %s30, %s37
      %s44 = sor.u32 %s42, %s43
      %p45 = scmp.eq.s32.totalorder %s44, 0
      %s47 = sadd.s32 %s46, 1
      %s48 = scalar_select %p45, %s46, %s47
      %p51 = pneg %p45
      %p52 = scmp.eq.s32.totalorder %s22, 1
      %p53 = por %p51, %p52
      %p54 = scmp.ne.s32.totalorder %s46, %s49
      %p55 = scmp.eq.s32.totalorder %s22, 0
      %p56 = por %p54, %p55
      %p57 = scmp.ne.s32.totalorder %s46, %s49
      %p58 = scmp.eq.s32.totalorder %s27, 1
      %p59 = por %p57, %p58
      %p60 = scmp.ne.s32.totalorder %s49, %s50
      %p61 = scmp.eq.s32.totalorder %s27, 0
      %p62 = por %p60, %p61
      %p63 = scmp.ne.s32.totalorder %s49, %s50
      %p64 = scmp.eq.s32.totalorder %s28, 1
      %p65 = por %p63, %p64
      %p67 = scmp.ne.s32.totalorder %s50, %s66
      %p68 = scmp.eq.s32.totalorder %s28, 0
      %p69 = por %p67, %p68
      %s70 = ssub.s32 %s29, %s41
      %s71 = ssub.s32 %s30, %s37
      %s72 = sor.u32 %s70, %s71
      %p73 = scmp.eq.s32.totalorder %s72, 0
      %s75 = sadd.s32 %s74, 1
      %s76 = scalar_select %p73, %s74, %s75
      %p79 = pneg %p73
      %p80 = scmp.eq.s32.totalorder %s22, 1
      %p81 = por %p79, %p80
      %p82 = scmp.ne.s32.totalorder %s74, %s77
      %p83 = scmp.eq.s32.totalorder %s22, 0
      %p84 = por %p82, %p83
      %p85 = scmp.ne.s32.totalorder %s74, %s77
      %p86 = scmp.eq.s32.totalorder %s27, 1
      %p87 = por %p85, %p86
      %p88 = scmp.ne.s32.totalorder %s77, %s78
      %p89 = scmp.eq.s32.totalorder %s27, 0
      %p90 = por %p88, %p89
      %p91 = scmp.ne.s32.totalorder %s77, %s78
      %p92 = scmp.eq.s32.totalorder %s28, 1
      %p93 = por %p91, %p92
      %p95 = scmp.ne.s32.totalorder %s78, %s94
      %p96 = scmp.eq.s32.totalorder %s28, 0
      %p97 = por %p95, %p96
      %s98 = ssub.s32 %s29, %s41
      %s99 = ssub.s32 %s30, %s37
      %s100 = sor.u32 %s98, %s99
      %p101 = scmp.eq.s32.totalorder %s100, 0
      %s103 = sadd.s32 %s102, 1
      %s104 = scalar_select %p101, %s102, %s103
      %p107 = pneg %p101
      %p108 = scmp.eq.s32.totalorder %s22, 1
      %p109 = por %p107, %p108
      %p110 = scmp.ne.s32.totalorder %s102, %s105
      %p111 = scmp.eq.s32.totalorder %s22, 0
      %p112 = por %p110, %p111
      %p113 = scmp.ne.s32.totalorder %s102, %s105
      %p114 = scmp.eq.s32.totalorder %s27, 1
      %p115 = por %p113, %p114
      %p116 = scmp.ne.s32.totalorder %s105, %s106
      %p117 = scmp.eq.s32.totalorder %s27, 0
      %p118 = por %p116, %p117
      %p119 = scmp.ne.s32.totalorder %s105, %s106
      %p120 = scmp.eq.s32.totalorder %s28, 1
      %p121 = por %p119, %p120
      %p123 = scmp.ne.s32.totalorder %s106, %s122
      %p124 = scmp.eq.s32.totalorder %s28, 0
      %p125 = por %p123, %p124
      %s126 = ssub.s32 %s29, %s41
      %s127 = ssub.s32 %s30, %s37
      %s128 = sor.u32 %s126, %s127
      %p129 = scmp.eq.s32.totalorder %s128, 0
      %s131 = sadd.s32 %s130, 1
      %s132 = scalar_select %p129, %s130, %s131
      %p135 = pneg %p129
      %p136 = scmp.eq.s32.totalorder %s22, 1
      %p137 = por %p135, %p136
      %p138 = scmp.ne.s32.totalorder %s130, %s133
      %p139 = scmp.eq.s32.totalorder %s22, 0
      %p140 = por %p138, %p139
      %p141 = scmp.ne.s32.totalorder %s130, %s133
      %p142 = scmp.eq.s32.totalorder %s27, 1
      %p143 = por %p141, %p142
      %p144 = scmp.ne.s32.totalorder %s133, %s134
      %p145 = scmp.eq.s32.totalorder %s27, 0
      %p146 = por %p144, %p145
      %p147 = scmp.ne.s32.totalorder %s133, %s134
      %p148 = scmp.eq.s32.totalorder %s28, 1
      %p149 = por %p147, %p148
      %p151 = scmp.ne.s32.totalorder %s134, %s150
      %p152 = scmp.eq.s32.totalorder %s28, 0
      %p153 = por %p151, %p152
      %s155 = sadd.s32 %s154, 1
      %p158 = scmp.eq.s32.totalorder %s22, 1
      %p159 = scmp.ne.s32.totalorder %s154, %s156
      %p160 = scmp.eq.s32.totalorder %s22, 0
      %p161 = por %p159, %p160
      %p162 = scmp.ne.s32.totalorder %s154, %s156
      %p163 = scmp.eq.s32.totalorder %s27, 1
      %p164 = por %p162, %p163
      %p165 = scmp.ne.s32.totalorder %s156, %s157
      %p166 = scmp.eq.s32.totalorder %s27, 0
      %p167 = por %p165, %p166
      %p168 = scmp.ne.s32.totalorder %s156, %s157
      %p169 = scmp.eq.s32.totalorder %s28, 1
      %p170 = por %p168, %p169
      %p172 = scmp.ne.s32.totalorder %s157, %s171
      %p173 = scmp.eq.s32.totalorder %s28, 0
      %p174 = por %p172, %p173
      %s176 = sadd.s32 %s175, 1
      %p179 = scmp.eq.s32.totalorder %s22, 1
      %p180 = scmp.ne.s32.totalorder %s175, %s177
      %p181 = scmp.eq.s32.totalorder %s22, 0
      %p182 = por %p180, %p181
      %p183 = scmp.ne.s32.totalorder %s175, %s177
      %p184 = scmp.eq.s32.totalorder %s27, 1
      %p185 = por %p183, %p184
      %p186 = scmp.ne.s32.totalorder %s177, %s178
      %p187 = scmp.eq.s32.totalorder %s27, 0
      %p188 = por %p186, %p187
      %p189 = scmp.ne.s32.totalorder %s177, %s178
      %p190 = scmp.eq.s32.totalorder %s28, 1
      %p191 = por %p189, %p190
      %p193 = scmp.ne.s32.totalorder %s178, %s192
      %p194 = scmp.eq.s32.totalorder %s28, 0
      %p195 = por %p193, %p194
      %s196 = ssub.s32 %s29, %s41
      %s197 = ssub.s32 %s30, %s37
      %s198 = sor.u32 %s196, %s197
      %p199 = scmp.eq.s32.totalorder %s198, 0
      %s201 = sadd.s32 %s200, 1
      %s202 = scalar_select %p199, %s200, %s201
      %p205 = pneg %p199
      %p206 = scmp.eq.s32.totalorder %s22, 1
      %p207 = por %p205, %p206
      %p208 = scmp.ne.s32.totalorder %s200, %s203
      %p209 = scmp.eq.s32.totalorder %s22, 0
      %p210 = por %p208, %p209
      %p211 = scmp.ne.s32.totalorder %s200, %s203
      %p212 = scmp.eq.s32.totalorder %s27, 1
      %p213 = por %p211, %p212
      %p214 = scmp.ne.s32.totalorder %s203, %s204
      %p215 = scmp.eq.s32.totalorder %s27, 0
      %p216 = por %p214, %p215
      %p217 = scmp.ne.s32.totalorder %s203, %s204
      %p218 = scmp.eq.s32.totalorder %s28, 1
      %p219 = por %p217, %p218
      %p221 = scmp.ne.s32.totalorder %s204, %s220
      %p222 = scmp.eq.s32.totalorder %s28, 0
      %p223 = por %p221, %p222
      %p224 = scmp.le.s32.totalorder 1, %s22
      %p225 = scmp.lt.s32.totalorder %s22, 3
      %p226 = pnand %p224, %p225
      %p227 = pneg %p226
      // Predicated region
      $region9: #{tpu_custom_call.1} parent=5 // pred_check
        _
      $region10: #{tpu_custom_call.1} parent=5 // pred_check_branch
        %229 = sbr.rel (%p226) target = $region12
      $region11: #{tpu_custom_call.1} parent=5 // pred_region
        %s230 = ssub.s32 %s22, 1
        // Predicated region
        $region13: #{tpu_custom_call.1} parent=11 // pred_check
          %p231 = pneg %p167
        $region14: #{tpu_custom_call.1} parent=11 // pred_check_branch
          %233 = sbr.rel (%p231) target = $region16
        $region15: #{tpu_custom_call.1} parent=11 // pred_region
          %s235 = ssub.s32 512, 512
          %236 = vsyncadd [#allocation9], %s235
          %s237 = sshll.u32 [#allocation8], 4
          %s238 = int_to_ptr.vmem [resolvable:$true] %s237
          %243 = dma.hbm_to_vmem [thread:$0]  %s4, 512, %s238, [#allocation9], 128, 128, 8
        $region16: #{tpu_custom_call.1} parent=11 // pred_fallthru
          _
        // Predicated region
        $region17: #{tpu_custom_call.1} parent=11 // pred_check
          %p244 = pneg %p188
        $region18: #{tpu_custom_call.1} parent=11 // pred_check_branch
          %246 = sbr.rel (%p244) target = $region20
        $region19: #{tpu_custom_call.1} parent=11 // pred_region
          _
        $region20: #{tpu_custom_call.1} parent=11 // pred_fallthru
          _
      $region12: #{tpu_custom_call.1} parent=5 // pred_fallthru
        _
      %p247 = scmp.lt.s32.totalorder %s22, 2
      // Predicated region
      $region21: #{tpu_custom_call.1} parent=5 // pred_check
        %p248 = pneg %p247
      $region22: #{tpu_custom_call.1} parent=5 // pred_check_branch
        %250 = sbr.rel (%p248) target = $region24
      $region23: #{tpu_custom_call.1} parent=5 // pred_region
        // Predicated region
        $region25: #{tpu_custom_call.1} parent=23 // pred_check
          %p251 = pneg %p56
        $region26: #{tpu_custom_call.1} parent=23 // pred_check_branch
          %253 = sbr.rel (%p251) target = $region28
        $region27: #{tpu_custom_call.1} parent=23 // pred_region
          %s254 = sand.u32 %s46, 1
          %s255 = scalar_lea.sflag [#allocation3], %s254
          %s256 = sand.u32 %s46, 1
          %s257 = smul.addr %s256, 8
          %s258 = scalar_lea.vmem [#allocation2], %s257
          %s260 = ssub.s32 128, 128
          %261 = vsyncadd %s255, %s260
          %s262 = smul.addr %s30, 2
          %s263 = smul.addr %s29, 2
          %s264 = sadd.s32 %s262, %s263
          %s265 = smul.addr %s264, 64
          %s266 = scalar_lea.hbm %s0, %s265
          %s267 = sshll.u32 %s258, 4
          %s268 = int_to_ptr.vmem [resolvable:$true] %s267
          %273 = dma.hbm_to_vmem [thread:$0]  %s266, 128, %s268, %s255, 64, 64, 4
        $region28: #{tpu_custom_call.1} parent=23 // pred_fallthru
          _
        // Predicated region
        $region29: #{tpu_custom_call.1} parent=23 // pred_check
          %p274 = pneg %p84
        $region30: #{tpu_custom_call.1} parent=23 // pred_check_branch
          %276 = sbr.rel (%p274) target = $region32
        $region31: #{tpu_custom_call.1} parent=23 // pred_region
          %s277 = sand.u32 %s22, 1
          %s278 = scalar_lea.sflag [#allocation6], %s277
          %s279 = sand.u32 %s74, 1
          %s280 = smul.addr %s279, 8
          %s281 = scalar_lea.vmem [#allocation5], %s280
          %s283 = ssub.s32 128, 128
          %284 = vsyncadd %s278, %s283
          %s285 = smul.addr %s30, 2
          %s286 = smul.addr %s29, 2
          %s287 = sadd.s32 %s285, %s286
          %s288 = smul.addr %s287, 64
          %s289 = scalar_lea.hbm %s1, %s288
          %s290 = sshll.u32 %s281, 4
          %s291 = int_to_ptr.vmem [resolvable:$true] %s290
          %296 = dma.hbm_to_vmem [thread:$0]  %s289, 128, %s291, %s278, 64, 64, 4
        $region32: #{tpu_custom_call.1} parent=23 // pred_fallthru
          _
        // Predicated region
        $region33: #{tpu_custom_call.1} parent=23 // pred_check
          %p297 = pneg %p112
        $region34: #{tpu_custom_call.1} parent=23 // pred_check_branch
          %299 = sbr.rel (%p297) target = $region36
        $region35: #{tpu_custom_call.1} parent=23 // pred_region
          %p300 = scmp.lt.s32.totalorder %s29, 1
          %s301 = scalar_select %p300, %s29, 1
          %p302 = scmp.lt.s32.totalorder %s30, 0
          %s303 = scalar_select %p302, %s30, 0
          %s304 = smul.addr %s303, 2
          %s305 = smul.addr %s301, 2
          %s306 = sadd.s32 %s304, %s305
          %s307 = smul.addr %s306, 4
          %s308 = scalar_lea.vmem %s2, %s307
        $region36: #{tpu_custom_call.1} parent=23 // pred_fallthru
          _
        // Predicated region
        $region37: #{tpu_custom_call.1} parent=23 // pred_check
          %p309 = pneg %p140
        $region38: #{tpu_custom_call.1} parent=23 // pred_check_branch
          %311 = sbr.rel (%p309) target = $region40
        $region39: #{tpu_custom_call.1} parent=23 // pred_region
          %s312 = sand.u32 %s22, 1
          %s313 = scalar_lea.sflag [#allocation6], %s312
          %s314 = sand.u32 %s130, 1
          %s315 = smul.addr %s314, 8
          %s316 = scalar_lea.vmem [#allocation7], %s315
          %s318 = ssub.s32 128, 128
          %319 = vsyncadd %s313, %s318
          %s320 = smul.addr %s30, 2
          %s321 = smul.addr %s29, 2
          %s322 = sadd.s32 %s320, %s321
          %s323 = smul.addr %s322, 64
          %s324 = scalar_lea.hbm %s3, %s323
          %s325 = sshll.u32 %s316, 4
          %s326 = int_to_ptr.vmem [resolvable:$true] %s325
          %331 = dma.hbm_to_vmem [thread:$0]  %s324, 128, %s326, %s313, 64, 64, 4
        $region40: #{tpu_custom_call.1} parent=23 // pred_fallthru
          _
      $region24: #{tpu_custom_call.1} parent=5 // pred_fallthru
        _
      %p332 = scmp.le.s32.totalorder 1, %s22
      %p333 = scmp.lt.s32.totalorder %s22, 3
      %p334 = pnand %p332, %p333
      %p335 = pneg %p334
      // Predicated region
      $region41: #{tpu_custom_call.1} parent=5 // pred_check
        _
      $region42: #{tpu_custom_call.1} parent=5 // pred_check_branch
        %337 = sbr.rel (%p334) target = $region44
      $region43: #{tpu_custom_call.1} parent=5 // pred_region
        %s338 = ssub.s32 %s22, 1
        %s339 = sand.u32 %s49, 1
        %s340 = scalar_lea.sflag [#allocation3], %s339
        %s341 = sand.u32 %s49, 1
        %s342 = smul.addr %s341, 8
        %s343 = scalar_lea.vmem [#allocation2], %s342
        // Predicated region
        $region45: #{tpu_custom_call.1} parent=43 // pred_check
          %p344 = pneg %p62
        $region46: #{tpu_custom_call.1} parent=43 // pred_check_branch
          %346 = sbr.rel (%p344) target = $region48
        $region47: #{tpu_custom_call.1} parent=43 // pred_region
          %347 = dma.done %s340, 128
        $region48: #{tpu_custom_call.1} parent=43 // pred_fallthru
          _
        %s348 = sand.u32 %s27, 1
        %s349 = scalar_lea.sflag [#allocation6], %s348
        %s350 = sand.u32 %s77, 1
        %s351 = smul.addr %s350, 8
        %s352 = scalar_lea.vmem [#allocation5], %s351
        // Predicated region
        $region49: #{tpu_custom_call.1} parent=43 // pred_check
          %p353 = pneg %p90
        $region50: #{tpu_custom_call.1} parent=43 // pred_check_branch
          %355 = sbr.rel (%p353) target = $region52
        $region51: #{tpu_custom_call.1} parent=43 // pred_region
          %356 = dma.done %s349, 128
        $region52: #{tpu_custom_call.1} parent=43 // pred_fallthru
          _
        %s357 = sand.u32 %s27, 1
        %s358 = scalar_lea.sflag [#allocation6], %s357
        %s359 = sand.u32 %s133, 1
        %s360 = smul.addr %s359, 8
        %s361 = scalar_lea.vmem [#allocation7], %s360
        // Predicated region
        $region53: #{tpu_custom_call.1} parent=43 // pred_check
          %p362 = pneg %p146
        $region54: #{tpu_custom_call.1} parent=43 // pred_check_branch
          %364 = sbr.rel (%p362) target = $region56
        $region55: #{tpu_custom_call.1} parent=43 // pred_region
          %365 = dma.done %s358, 128
        $region56: #{tpu_custom_call.1} parent=43 // pred_fallthru
          _
        // Predicated region
        $region57: #{tpu_custom_call.1} parent=43 // pred_check
          %p366 = pneg %p167
        $region58: #{tpu_custom_call.1} parent=43 // pred_check_branch
          %368 = sbr.rel (%p366) target = $region60
        $region59: #{tpu_custom_call.1} parent=43 // pred_region
          %369 = dma.done [#allocation9], 512
        $region60: #{tpu_custom_call.1} parent=43 // pred_fallthru
          _
        %s370 = sand.u32 %s49, 1
        %s371 = scalar_lea.sflag [#allocation3], %s370
        %s372 = sand.u32 %s49, 1
        %s373 = smul.addr %s372, 8
        %s374 = scalar_lea.vmem [#allocation2], %s373
        %p375 = pneg %p62
        %p376 = pneg %p59
        %s377 = sand.u32 %s27, 1
        %s378 = scalar_lea.sflag [#allocation6], %s377
        %s379 = sand.u32 %s77, 1
        %s380 = smul.addr %s379, 8
        %s381 = scalar_lea.vmem [#allocation5], %s380
        %p382 = pneg %p90
        %p383 = pneg %p87
        %p384 = scmp.lt.s32.totalorder %s31, 1
        %s385 = scalar_select %p384, %s31, 1
        %p386 = scmp.lt.s32.totalorder %s32, 0
        %s387 = scalar_select %p386, %s32, 0
        %s388 = smul.addr %s387, 2
        %s389 = smul.addr %s385, 2
        %s390 = sadd.s32 %s388, %s389
        %s391 = smul.addr %s390, 4
        %s392 = scalar_lea.vmem %s2, %s391
        %p393 = pneg %p118
        %p394 = pneg %p115
        %s395 = sand.u32 %s27, 1
        %s396 = scalar_lea.sflag [#allocation6], %s395
        %s397 = sand.u32 %s133, 1
        %s398 = smul.addr %s397, 8
        %s399 = scalar_lea.vmem [#allocation7], %s398
        %p400 = pneg %p146
        %p401 = pneg %p143
        %p402 = pneg %p167
        %p403 = pneg %p164
        %p404 = pneg %p188
        %p405 = pneg %p185
        %p406 = pneg %p216
        %p407 = pneg %p213
        %s408 = sand.u32 %s203, 1
        %s409 = scalar_lea.sflag [#allocation4], %s408
        %s410 = sand.u32 %s203, 1
        %s411 = smul.addr %s410, 8
        %s412 = scalar_lea.vmem [#allocation10], %s411
        %p413 = scmp.lt.s32.totalorder %s31, 1
        %s414 = scalar_select %p413, %s31, 1
        %p415 = scmp.lt.s32.totalorder %s32, 0
        %s416 = scalar_select %p415, %s32, 0
        %s417 = smul.addr %s416, 2
        %s418 = smul.addr %s414, 2
        %s419 = sadd.s32 %s417, %s418
        %s420 = smul.addr %s419, 4
        %s421 = scalar_lea.vmem %s2, %s420
        %v423 = vld [vmem:[%s343] sm:$0xf]
        %v424 = vld [vmem:[%s343 + $0x4] sm:$0xf]
        %v425 = vld [vmem:[%s352] sm:$0xf]
        %v426 = vld [vmem:[%s352 + $0x4] sm:$0xf]
        %v427 = vld [vmem:[%s421] sm:$0xf]
        %v428 = vld [vmem:[%s421 + $0x4] sm:$0xf]
        %v429 = vld [vmem:[%s361] sm:$0xf]
        %v430 = vld [vmem:[%s361 + $0x4] sm:$0xf]
        %v433 = vunpack.c.l.b16 %v423
        %v434 = vunpack.c.l.b16 %v424
        %v435 = vpack.c.b16 %v434, %v433
        %437 = vrot.lane.b32.xlu0 %v435, 127
        %v438 = vpop.permute.xlu0 %437
        %v442 = vunpack.c.l.b16 %v425
        %v443 = vunpack.c.l.b16 %v426
        %v444 = vpack.c.b16 %v443, %v442
        %446 = vrot.lane.b32.xlu0 %v444, 127
        %v447 = vpop.permute.xlu0 %446
        %449 = vrot.lane.b32.xlu0 %v435, 119
        %v450 = vpop.permute.xlu0 %449
        %452 = vrot.lane.b32.xlu0 %v435, 118
        %v453 = vpop.permute.xlu0 %452
        %455 = vrot.lane.b32.xlu0 %v444, 119
        %v456 = vpop.permute.xlu0 %455
        %458 = vrot.lane.b32.xlu0 %v444, 118
        %v459 = vpop.permute.xlu0 %458
        %v463 = vunpack.c.l.b16 %v427
        %v464 = vunpack.c.l.b16 %v428
        %v465 = vpack.c.b16 %v464, %v463
        %467 = vrot.lane.b32.xlu0 %v465, 127
        %v468 = vpop.permute.xlu0 %467
        %v472 = vunpack.c.l.b16 %v429
        %v473 = vunpack.c.l.b16 %v430
        %v474 = vpack.c.b16 %v473, %v472
        %476 = vrot.lane.b32.xlu0 %v474, 127
        %v477 = vpop.permute.xlu0 %476
        %479 = vrot.lane.b32.xlu0 %v465, 119
        %v480 = vpop.permute.xlu0 %479
        %482 = vrot.lane.b32.xlu0 %v465, 118
        %v483 = vpop.permute.xlu0 %482
        %485 = vrot.lane.b32.xlu0 %v474, 119
        %v486 = vpop.permute.xlu0 %485
        %488 = vrot.lane.b32.xlu0 %v474, 118
        %v489 = vpop.permute.xlu0 %488
        %v491 = vld [vmem:[#allocation8] sm:$0xff]
        %v492 = vld [vmem:[#allocation8 + $0x8] sm:$0xff]
        %v493 = vld [vmem:[#allocation8 + $0x10] sm:$0xff]
        %v494 = vld [vmem:[#allocation8 + $0x18] sm:$0xff]
        %v499 = vunpack.c.l.b16 %v491
        %v500 = vunpack.c.h.b16 %v491
        %v501 = vunpack.c.l.b16 %v492
        %v502 = vunpack.c.h.b16 %v492
        %v503 = vunpack.c.l.b16 %v493
        %v504 = vunpack.c.h.b16 %v493
        %v505 = vunpack.c.l.b16 %v494
        %v506 = vunpack.c.h.b16 %v494
        %v507 = vpack.c.b16 %v501, %v499
        %v508 = vpack.c.b16 %v502, %v500
        %v509 = vpack.c.b16 %v505, %v503
        %v510 = vpack.c.b16 %v506, %v504
        %515 = vmatprep.subr.bf16.mxu0 0
        %516 = vmatpush1.bf16.msra.mxu0 %v435
        %517 = vmatprep.subr.bf16.mxu0 0
        %518 = vmatpush1.bf16.msra.mxu0 %v438
        %519 = vmatprep.subr.bf16.mxu0 0
        %520 = vmatpush1.bf16.msra.mxu0 %v444
        %521 = vmatprep.subr.bf16.mxu0 0
        %522 = vmatpush1.bf16.msra.mxu0 %v447
        %523 = vmatprep.subr.bf16.mxu0 0
        %524 = vmatpush1.bf16.msra.mxu0 %v450
        %525 = vmatprep.subr.bf16.mxu0 0
        %526 = vmatpush1.bf16.msra.mxu0 %v453
        %527 = vmatprep.subr.bf16.mxu0 0
        %528 = vmatpush1.bf16.msra.mxu0 %v456
        %529 = vmatprep.subr.bf16.mxu0 0
        %530 = vmatpush1.bf16.msra.mxu0 %v459
        %531 = vmatprep.subr.bf16.mxu0 0
        %532 = vmatpush1.bf16.msra.mxu0 %v465
        %533 = vmatprep.subr.bf16.mxu0 0
        %534 = vmatpush1.bf16.msra.mxu0 %v468
        %535 = vmatprep.subr.bf16.mxu0 0
        %536 = vmatpush1.bf16.msra.mxu0 %v474
        %537 = vmatprep.subr.bf16.mxu0 0
        %538 = vmatpush1.bf16.msra.mxu0 %v477
        %539 = vmatprep.subr.bf16.mxu0 0
        %540 = vmatpush1.bf16.msra.mxu0 %v480
        %541 = vmatprep.subr.bf16.mxu0 0
        %542 = vmatpush1.bf16.msra.mxu0 %v483
        %543 = vmatprep.subr.bf16.mxu0 0
        %544 = vmatpush1.bf16.msra.mxu0 %v486
        %545 = vmatprep.subr.bf16.mxu0 0
        %546 = vmatpush1.bf16.msra.mxu0 %v489
        %547 = vmatprep.mubr.bf16.mxu0 %v508
        %548 = vmatmul.mubr.bf16.gmra.mrb[0].mxu0 %v507
        %v549 = vpop.f32.mrb[0].mxu0
        %v550 = vadd.f32 0.0, %v549
        %v551 = vpop.f32.mrb[0].mxu0
        %v552 = vpop.f32.mrb[0].mxu0
        %v553 = vadd.f32 0.0, %v552
        %v554 = vpop.f32.mrb[0].mxu0
        %555 = vmatprep.mubr.bf16.mxu0 %v510
        %556 = vmatmul.mubr.bf16.gmra.mrb[0].mxu0 %v509
        %v557 = vpop.f32.mrb[0].mxu0
        %v558 = vadd.f32 0.0, %v557
        %v559 = vpop.f32.mrb[0].mxu0
        %v560 = vpop.f32.mrb[0].mxu0
        %v561 = vadd.f32 0.0, %v560
        %v562 = vpop.f32.mrb[0].mxu0
        %563 = vdwg.mxu0
        %v564 = vmax.f32 %v550, %v553
        %v565 = vmax.f32 %v558, %v561
        %v566 = vmax.f32 %v564, %v565
        %v567 = vld [vmem:[%s5] sm:$0xff]
        %569 = vset.pattern.permute.xlu0 0
        %570 = vperm.xlu0 %569, %v567
        %v571 = vpop.permute.xlu0 %570
        %v573 = vadd.f32 %v566, %v571
        %v574 = vmax.f32 %v573, 0.0
        %vm575 = vcmask 588800
        %576 = vst.msk [vmem:[%s412] sm:$0xff] %vm575, %v574
        %s577 = sand.u32 %s203, 1
        %s578 = scalar_lea.sflag [#allocation4], %s577
        %s579 = sand.u32 %s203, 1
        %s580 = smul.addr %s579, 8
        %s581 = scalar_lea.vmem [#allocation10], %s580
        // Predicated region
        $region61: #{tpu_custom_call.1} parent=43 // pred_check
          %p582 = pneg %p213
        $region62: #{tpu_custom_call.1} parent=43 // pred_check_branch
          %584 = sbr.rel (%p582) target = $region64
        $region63: #{tpu_custom_call.1} parent=43 // pred_region
          %s586 = ssub.s32 128, 128
          %587 = vsyncadd %s578, %s586
          %s588 = sadd.s32 %s32, %s31
          %s589 = smul.addr %s588, 128
          %s590 = scalar_lea.hbm %s6, %s589
          %s592 = sshll.u32 %s581, 4
          %s593 = int_to_ptr.vmem [resolvable:$true] %s592
          %595 = dma.vmem_to_hbm [thread:$0]  %s593, 128, %s590, %s578
        $region64: #{tpu_custom_call.1} parent=43 // pred_fallthru
          _
      $region44: #{tpu_custom_call.1} parent=5 // pred_fallthru
        _
      %p596 = scmp.le.s32.totalorder 2, %s22
      // Predicated region
      $region65: #{tpu_custom_call.1} parent=5 // pred_check
        %p597 = pneg %p596
      $region66: #{tpu_custom_call.1} parent=5 // pred_check_branch
        %599 = sbr.rel (%p597) target = $region68
      $region67: #{tpu_custom_call.1} parent=5 // pred_region
        %s600 = ssub.s32 %s22, 2
        // Predicated region
        $region69: #{tpu_custom_call.1} parent=67 // pred_check
          %p601 = pneg %p219
        $region70: #{tpu_custom_call.1} parent=67 // pred_check_branch
          %603 = sbr.rel (%p601) target = $region72
        $region71: #{tpu_custom_call.1} parent=67 // pred_region
          %s604 = sand.u32 %s204, 1
          %s605 = scalar_lea.sflag [#allocation4], %s604
          %s606 = sand.u32 %s204, 1
          %s607 = smul.addr %s606, 8
          %s608 = scalar_lea.vmem [#allocation10], %s607
          %609 = dma.done %s605, 128
        $region72: #{tpu_custom_call.1} parent=67 // pred_fallthru
          _
      $region68: #{tpu_custom_call.1} parent=5 // pred_fallthru
        _
    $region6: #{tpu_custom_call.1} parent=1 // loop_footer
      %s26 = sadd.s32 1, %s22
    $region7: #{tpu_custom_call.1} parent=1 // loop_footer_branch
      %21 = sbr.rel target = $region3
    $region8: #{tpu_custom_call.1} parent=1 // loop_exit
      _
    %610 = vsyncpa [#allocation3], 1
    %s611 = scalar_lea.sflag [#allocation3], 1
    %612 = vsyncpa %s611, 1
    %613 = vsyncpa [#allocation6], 1
    %s614 = scalar_lea.sflag [#allocation6], 1
    %615 = vsyncpa %s614, 1
    %616 = vsyncpa [#allocation9], 1
    %617 = vsyncpa [#allocation4], 1
    %s618 = scalar_lea.sflag [#allocation4], 1
    %619 = vsyncpa %s618, 1

</llo_original>
